<compile_context>
chip_gen: v5e
topology: v5e:2x2
jax: 0.10.0
libtpu: 0.0.40
codegen_flags: <defaults>
</compile_context>

<pallas_src>
import functools
import math

import jax
import jax.numpy as jnp
from jax.experimental import pallas as pl
from jax.experimental.pallas import tpu as pltpu


# ------------------------------------------------------------------
# small helpers
# ------------------------------------------------------------------

def _round_up(x, m):
    return ((x + m - 1) // m) * m


def _pad2d(a, rows, cols):
    r, c = a.shape
    if r == rows and c == cols:
        return a
    return jnp.pad(a, ((0, rows - r), (0, cols - c)))


def _sublane_multiple(dtype):
    return {4: 8, 2: 16, 1: 32}.get(jnp.dtype(dtype).itemsize, 8)


_VMEM_LIMIT_CACHE = [None]


def _vmem_limit_bytes():
    """VMEM limit derived from the chip: capacity - 16 MiB headroom, <= 96 MiB."""
    if _VMEM_LIMIT_CACHE[0] is None:
        cap = 64 * 1024 * 1024
        try:
            info = pltpu.get_tpu_info()
            cap = int(getattr(info, "vmem_capacity_bytes", cap))
        except Exception:
            pass
        _VMEM_LIMIT_CACHE[0] = int(
            min(max(cap - 16 * 1024 * 1024, 32 * 1024 * 1024), 96 * 1024 * 1024))
    return _VMEM_LIMIT_CACHE[0]


# ------------------------------------------------------------------
# Kernel 1: fully fused MLP (all layers), grid over M tiles only
# ------------------------------------------------------------------

def _fused_mlp_kernel(*refs, n_layers, has_bias, compute_dtype):
    # refs = (x_ref, [w_0, (b_0), w_1, (b_1), ...], o_ref)
    x_ref = refs[0]
    o_ref = refs[-1]
    layer_refs = refs[1:-1]
    step = 2 if has_bias else 1

    h = x_ref[...]                                  # (tm, K0p), compute dtype
    for l in range(n_layers):
        w_ref = layer_refs[l * step]
        b_ref = layer_refs[l * step + 1] if has_bias else None
        # MXU matmul, f32 accumulation regardless of operand dtype.
        y = jnp.dot(h, w_ref[...], preferred_element_type=jnp.float32)
        if has_bias:
            y = y + b_ref[...]                      # f32 epilogue
        if l < n_layers - 1:
            y = jnp.tanh(y)                         # EUP, f32
            h = y.astype(compute_dtype)             # stays in VMEM for next layer
        else:
            o_ref[...] = y.astype(o_ref.dtype)


def _pallas_mlp_fused(x_p, w_pads, b_pads, *, n_layers, has_bias,
                      compute_dtype, tm, out_dtype):
    Mp, K0p = x_p.shape
    NLp = w_pads[-1].shape[1]

    operands = [x_p]
    in_specs = [pl.BlockSpec((tm, K0p), lambda i: (i, 0))]
    for l in range(n_layers):
        Kp, Np = w_pads[l].shape
        operands.append(w_pads[l])
        in_specs.append(pl.BlockSpec((Kp, Np), lambda i: (0, 0)))
        if has_bias:
            operands.append(b_pads[l])
            in_specs.append(pl.BlockSpec((1, Np), lambda i: (0, 0)))

    kern = functools.partial(_fused_mlp_kernel, n_layers=n_layers,
                             has_bias=has_bias, compute_dtype=compute_dtype)

    return pl.pallas_call(
        kern,
        out_shape=jax.ShapeDtypeStruct((Mp, NLp), out_dtype),
        grid_spec=pltpu.PrefetchScalarGridSpec(
            num_scalar_prefetch=0,
            grid=(Mp // tm,),
            in_specs=in_specs,
            out_specs=pl.BlockSpec((tm, NLp), lambda i: (i, 0))),
        compiler_params=pltpu.CompilerParams(
            dimension_semantics=("parallel",),
            vmem_limit_bytes=_vmem_limit_bytes()),
    )(*operands)


# ------------------------------------------------------------------
# Kernel 2: per-layer tiled Linear (+bias) (+tanh), K-axis accumulation
# ------------------------------------------------------------------

def _linear_out_acc_kernel(x_ref, w_ref, *rest, act, has_bias):
    """f32 output: accumulate directly into the resident output block."""
    if has_bias:
        b_ref, o_ref = rest
    else:
        b_ref = None
        (o_ref,) = rest

    k = pl.program_id(2)

    @pl.when(k == 0)
    def _():
        o_ref[...] = jnp.zeros_like(o_ref)

    o_ref[...] += jnp.dot(x_ref[...], w_ref[...],
                          preferred_element_type=jnp.float32)

    @pl.when(k == pl.num_programs(2) - 1)
    def _():
        y = o_ref[...]
        if has_bias:
            y = y + b_ref[...]
        if act:
            y = jnp.tanh(y)
        o_ref[...] = y


def _linear_scratch_kernel(x_ref, w_ref, *rest, act, has_bias):
    """Non-f32 (bf16) output: f32 VMEM scratch accumulator, cast on final store."""
    if has_bias:
        b_ref, o_ref, acc_ref = rest
    else:
        b_ref = None
        o_ref, acc_ref = rest

    k = pl.program_id(2)

    @pl.when(k == 0)
    def _():
        acc_ref[...] = jnp.zeros_like(acc_ref)

    acc_ref[...] += jnp.dot(x_ref[...], w_ref[...],
                            preferred_element_type=jnp.float32)

    @pl.when(k == pl.num_programs(2) - 1)
    def _():
        y = acc_ref[...]
        if has_bias:
            y = y + b_ref[...]
        if act:
            y = jnp.tanh(y)
        o_ref[...] = y.astype(o_ref.dtype)


def _pallas_linear_padded(x_p, w_p, b_p, *, act, out_dtype, tm, tn, tk):
    """y = act(x_p @ w_p + b_p) on pre-padded operands (all dims tile-aligned)."""
    Mp, Kp = x_p.shape
    Kw, Np = w_p.shape
    assert Kp == Kw and Mp % tm == 0 and Np % tn == 0 and Kp % tk == 0

    has_bias = b_p is not None
    operands = [x_p, w_p]
    in_specs = [pl.BlockSpec((tm, tk), lambda i, j, k: (i, k)),
                pl.BlockSpec((tk, tn), lambda i, j, k: (k, j))]
    if has_bias:
        operands.append(b_p)
        in_specs.append(pl.BlockSpec((1, tn), lambda i, j, k: (0, j)))

    out_is_f32 = jnp.dtype(out_dtype) == jnp.dtype(jnp.float32)
    if out_is_f32:
        kern = functools.partial(_linear_out_acc_kernel, act=act, has_bias=has_bias)
        scratch = []
    else:
        kern = functools.partial(_linear_scratch_kernel, act=act, has_bias=has_bias)
        scratch = [pltpu.VMEM((tm, tn), jnp.float32)]

    return pl.pallas_call(
        kern,
        out_shape=jax.ShapeDtypeStruct((Mp, Np), out_dtype),
        grid_spec=pltpu.PrefetchScalarGridSpec(
            num_scalar_prefetch=0,
            grid=(Mp // tm, Np // tn, Kp // tk),
            in_specs=in_specs,
            out_specs=pl.BlockSpec((tm, tn), lambda i, j, k: (i, j)),
            scratch_shapes=scratch),
        compiler_params=pltpu.CompilerParams(
            dimension_semantics=("parallel", "parallel", "arbitrary"),
            vmem_limit_bytes=_vmem_limit_bytes()),
    )(*operands)


# ------------------------------------------------------------------
# MLP: init, prepare (pad/cast weights once), jitted forward
# ------------------------------------------------------------------

def mlp_init(key, sizes, bias=True):
    """Match nn.Linear-style init: U(-1/sqrt(fan_in), +1/sqrt(fan_in))."""
    params = []
    for i in range(len(sizes) - 1):
        key, kw, kb = jax.random.split(key, 3)
        fan_in, fan_out = sizes[i], sizes[i + 1]
        bound = 1.0 / math.sqrt(fan_in)
        w = jax.random.uniform(kw, (fan_in, fan_out), jnp.float32,
                               minval=-bound, maxval=bound)
        bvec = (jax.random.uniform(kb, (fan_out,), jnp.float32,
                                   minval=-bound, maxval=bound)
                if bias else None)
        params.append((w, bvec))
    return params


def make_mlp_forward(params, *, mxu_dtype=None, tm=512, tn=512, tk=1024,
                     fuse=None):
    """Prepare (pad + cast weights once) and return a jitted forward fn.

    mxu_dtype: optional (e.g. jnp.bfloat16) operand dtype for the MXU; f32
               accumulation and f32 bias/tanh epilogue are kept.  Bias stays
               f32.  Final output is always f32 (module semantics).
    fuse:      force the fused (True) or per-layer (False) path; default:
               fuse iff the padded weights fit a VMEM budget.
    """
    compute_dtype = jnp.dtype(mxu_dtype) if mxu_dtype is not None else jnp.dtype(jnp.float32)
    is_f32 = compute_dtype == jnp.dtype(jnp.float32)
    itemsize = compute_dtype.itemsize
    sub = _sublane_multiple(compute_dtype)

    n_layers = len(params)
    has_bias = params[0][1] is not None
    sizes = [params[0][0].shape[0]] + [w.shape[1] for (w, _) in params]
    n_out = sizes[-1]

    # ---- decide fused vs per-layer (static, M-independent) -------------
    dpad = [_round_up(s, 128) for s in sizes]            # lane-aligned dims
    if fuse is None:
        tm_max = min(tm, 512)
        est = 0
        for l in range(n_layers):
            est += 2 * dpad[l] * dpad[l + 1] * itemsize          # weights (2x buf)
            if has_bias:
                est += 2 * dpad[l + 1] * 4                       # f32 bias
        est += 2 * tm_max * dpad[0] * itemsize                   # x tile
        est += 2 * tm_max * dpad[-1] * 4                         # f32 out tile
        est += 3 * tm_max * max(dpad[1:]) * 4                    # f32 intermediates
        use_fused = est <= int(0.5 * _vmem_limit_bytes())
    else:
        use_fused = bool(fuse)

    # ---- pad + cast weights ONCE (no per-call pad/cast HBM passes) -----
    w_pads, b_pads, layer_tiles = [], [], []
    for l, (w, b) in enumerate(params):
        K, N = w.shape
        if use_fused:
            Kp, Np = dpad[l], dpad[l + 1]
            tk_l = tn_l = None
        else:
            tk_l = min(tk, _round_up(K, 128))
            tn_l = min(tn, _round_up(N, 128))
            Kp, Np = _round_up(K, tk_l), _round_up(N, tn_l)
        w_pads.append(_pad2d(w, Kp, Np).astype(compute_dtype))
        b_pads.append(_pad2d(b.reshape(1, N).astype(jnp.float32), 1, Np)
                      if has_bias else None)
        layer_tiles.append((tk_l, tn_l))

    # ---- jitted forward -------------------------------------------------
    def fwd(x):
        lead_shape = x.shape[:-1]
        h = x.reshape(-1, x.shape[-1]).astype(jnp.float32)
        M = h.shape[0]
        tm_eff = min(tm, _round_up(max(M, 1), sub))       # dtype-aware sublane
        Mp = _round_up(M, tm_eff)

        if use_fused:
            x_p = _pad2d(h, Mp, w_pads[0].shape[0]).astype(compute_dtype)
            out_p = _pallas_mlp_fused(
                x_p, w_pads, b_pads, n_layers=n_layers, has_bias=has_bias,
                compute_dtype=compute_dtype, tm=tm_eff, out_dtype=jnp.float32)
            out = out_p[:M, :n_out]
        else:
            hcur = _pad2d(h, Mp, w_pads[0].shape[0]).astype(compute_dtype)
            for l in range(n_layers):
                Kp, Np = w_pads[l].shape
                cw = hcur.shape[1]
                if cw < Kp:                      # re-align interface width
                    hcur = jnp.pad(hcur, ((0, 0), (0, Kp - cw)))
                elif cw > Kp:
                    hcur = hcur[:, :Kp]
                act = l < n_layers - 1
                out_dtype = compute_dtype if (act and not is_f32) else jnp.float32
                tk_l, tn_l = layer_tiles[l]
                hcur = _pallas_linear_padded(
                    hcur, w_pads[l], b_pads[l], act=act, out_dtype=out_dtype,
                    tm=tm_eff, tn=tn_l, tk=tk_l)
            out = hcur[:M, :n_out].astype(jnp.float32)

        return out.reshape(*lead_shape, n_out)

    return jax.jit(fwd)


def mlp_reference(params, x):
    """Pure-JAX reference for correctness checking."""
    h = x.reshape(-1, x.shape[-1]).astype(jnp.float32)
    n_layers = len(params)
    for i, (w, b) in enumerate(params):
        h = h @ w
        if b is not None:
            h = h + b
        if i < n_layers - 1:
            h = jnp.tanh(h)
    return h.reshape(*x.shape[:-1], h.shape[-1])


# ------------------------------------------------------------------
# main
# ------------------------------------------------------------------

if __name__ == "__main__":
    batch = 2
    sizes = (32, 64, 16)          # Linear(32,64) -> Tanh -> Linear(64,16)

    root = jax.random.PRNGKey(0)
    k_params, k_x = jax.random.split(root)

    params = mlp_init(k_params, sizes, bias=True)
    x = jax.random.normal(k_x, (batch, sizes[0]), jnp.float32)
    y_ref = mlp_reference(params, x)

    # 1) fused kernel, f32 (exact semantics of the PyTorch module)
    fwd_f32 = make_mlp_forward(params)
    y = fwd_f32(x)
    jax.block_until_ready(y)
    assert y.shape == (batch, sizes[-1]), y.shape
    assert bool(jnp.all(jnp.isfinite(y)))
    assert jnp.allclose(y, y_ref, rtol=1e-4, atol=1e-4), float(
        jnp.max(jnp.abs(y - y_ref)))

    # 2) fused kernel, bf16 MXU operands (f32 accumulation + epilogue)
    fwd_bf16 = make_mlp_forward(params, mxu_dtype=jnp.bfloat16)
    y_bf16 = fwd_bf16(x)
    jax.block_until_ready(y_bf16)
    assert jnp.allclose(y_bf16, y_ref, rtol=5e-2, atol=5e-2), float(
        jnp.max(jnp.abs(y_bf16 - y_ref)))

    # 3) per-layer tiled fallback path, f32 (exercised explicitly)
    fwd_f32_tiled = make_mlp_forward(params, fuse=False)
    y_t = fwd_f32_tiled(x)
    jax.block_until_ready(y_t)
    assert jnp.allclose(y_t, y_ref, rtol=1e-4, atol=1e-4), float(
        jnp.max(jnp.abs(y_t - y_ref)))

    # 4) per-layer tiled fallback path, bf16 operands + bf16 inter-layer acts
    fwd_bf16_tiled = make_mlp_forward(params, mxu_dtype=jnp.bfloat16, fuse=False)
    y_tb = fwd_bf16_tiled(x)
    jax.block_until_ready(y_tb)
    assert jnp.allclose(y_tb, y_ref, rtol=5e-2, atol=5e-2), float(
        jnp.max(jnp.abs(y_tb - y_ref)))

    print("KERNEL_OK")
</pallas_src>

<mosaic_0001>
module attributes {stable_mosaic.version = 11 : i64} {
  func.func @_fused_mlp_kernel(%arg0: i32, %arg1: memref<8x128xf32, #tpu.memory_space<vmem>>, %arg2: memref<128x128xf32, #tpu.memory_space<vmem>>, %arg3: memref<1x128xf32, #tpu.memory_space<vmem>>, %arg4: memref<128x128xf32, #tpu.memory_space<vmem>>, %arg5: memref<1x128xf32, #tpu.memory_space<vmem>>, %arg6: memref<8x128xf32, #tpu.memory_space<vmem>>) attributes {dimension_semantics = [#tpu.dimension_semantics<parallel>], iteration_bounds = array<i64: 1>, scalar_prefetch = 0 : i64, scratch_operands = 0 : i64, tpu.core_type = #tpu.core_type<tc>, window_params = [{transform_indices = @transform_0, window_bounds = array<i64: 8, 128>}, {pipeline_mode = #tpu.pipeline_mode<synchronous>, transform_indices = @transform_1, window_bounds = array<i64: 128, 128>}, {pipeline_mode = #tpu.pipeline_mode<synchronous>, transform_indices = @transform_2, window_bounds = array<i64: 1, 128>}, {pipeline_mode = #tpu.pipeline_mode<synchronous>, transform_indices = @transform_3, window_bounds = array<i64: 128, 128>}, {pipeline_mode = #tpu.pipeline_mode<synchronous>, transform_indices = @transform_4, window_bounds = array<i64: 1, 128>}, {transform_indices = @transform_5, window_bounds = array<i64: 8, 128>}]} {
    %c0 = arith.constant 0 : index
    %c0_0 = arith.constant 0 : index
    %0 = vector.load %arg1[%c0, %c0_0] : memref<8x128xf32, #tpu.memory_space<vmem>>, vector<8x128xf32>
    %c0_1 = arith.constant 0 : index
    %c0_2 = arith.constant 0 : index
    %1 = vector.load %arg2[%c0_1, %c0_2] : memref<128x128xf32, #tpu.memory_space<vmem>>, vector<128x128xf32>
    %cst = arith.constant dense<0.000000e+00> : vector<8x128xf32>
    %2 = tpu.matmul %0, %1, %cst {dimension_numbers = #tpu.dot_dimension_numbers<[1], [0], [0], [1], [0, 0, 1, 1], [], []>} : vector<8x128xf32>, vector<128x128xf32>, vector<8x128xf32> -> vector<8x128xf32>
    %c0_3 = arith.constant 0 : index
    %c0_4 = arith.constant 0 : index
    %3 = vector.load %arg3[%c0_3, %c0_4] : memref<1x128xf32, #tpu.memory_space<vmem>>, vector<1x128xf32>
    %4 = vector.broadcast %3 : vector<1x128xf32> to vector<8x128xf32>
    %5 = arith.addf %2, %4 : vector<8x128xf32>
    %6 = math.tanh %5 : vector<8x128xf32>
    %c0_5 = arith.constant 0 : index
    %c0_6 = arith.constant 0 : index
    %7 = vector.load %arg4[%c0_5, %c0_6] : memref<128x128xf32, #tpu.memory_space<vmem>>, vector<128x128xf32>
    %cst_7 = arith.constant dense<0.000000e+00> : vector<8x128xf32>
    %8 = tpu.matmul %6, %7, %cst_7 {dimension_numbers = #tpu.dot_dimension_numbers<[1], [0], [0], [1], [0, 0, 1, 1], [], []>} : vector<8x128xf32>, vector<128x128xf32>, vector<8x128xf32> -> vector<8x128xf32>
    %c0_8 = arith.constant 0 : index
    %c0_9 = arith.constant 0 : index
    %9 = vector.load %arg5[%c0_8, %c0_9] : memref<1x128xf32, #tpu.memory_space<vmem>>, vector<1x128xf32>
    %10 = vector.broadcast %9 : vector<1x128xf32> to vector<8x128xf32>
    %11 = arith.addf %8, %10 : vector<8x128xf32>
    %c0_10 = arith.constant 0 : index
    %c0_11 = arith.constant 0 : index
    %12 = vector.load %arg6[%c0_10, %c0_11] : memref<8x128xf32, #tpu.memory_space<vmem>>, vector<8x128xf32>
    tpu.vector_store %arg6[%c0_10, %c0_11], %11 {strides = array<i32>} : memref<8x128xf32, #tpu.memory_space<vmem>>, vector<8x128xf32>,
    return
  }
  func.func @transform_0(%arg0: i32) -> (i32, i32) {
    %c0_i32 = arith.constant 0 : i32
    %c0_i32_0 = arith.constant 0 : i32
    return %arg0, %c0_i32 : i32, i32
  }
  func.func @transform_1(%arg0: i32) -> (i32, i32) {
    %c0_i32 = arith.constant 0 : i32
    %c0_i32_0 = arith.constant 0 : i32
    %c0_i32_1 = arith.constant 0 : i32
    return %c0_i32, %c0_i32_0 : i32, i32
  }
  func.func @transform_2(%arg0: i32) -> (i32, i32) {
    %c0_i32 = arith.constant 0 : i32
    %c0_i32_0 = arith.constant 0 : i32
    %c0_i32_1 = arith.constant 0 : i32
    return %c0_i32, %c0_i32_0 : i32, i32
  }
  func.func @transform_3(%arg0: i32) -> (i32, i32) {
    %c0_i32 = arith.constant 0 : i32
    %c0_i32_0 = arith.constant 0 : i32
    %c0_i32_1 = arith.constant 0 : i32
    return %c0_i32, %c0_i32_0 : i32, i32
  }
  func.func @transform_4(%arg0: i32) -> (i32, i32) {
    %c0_i32 = arith.constant 0 : i32
    %c0_i32_0 = arith.constant 0 : i32
    %c0_i32_1 = arith.constant 0 : i32
    return %c0_i32, %c0_i32_0 : i32, i32
  }
  func.func @transform_5(%arg0: i32) -> (i32, i32) {
    %c0_i32 = arith.constant 0 : i32
    %c0_i32_0 = arith.constant 0 : i32
    return %arg0, %c0_i32 : i32, i32
  }
}

</mosaic_0001>

<llo_original>
// kernel: fwd.1
$region0: #{fwd.1}
  #allocation0 [shape = 'u32[]', space=smem, size = 0x4, offset = 0x4, fixed_abs, tag = 'smem constant byte address 0x4 - core index']
  #allocation1 [shape = 'u32[72,128]{1,0:T(1,128)}', space=vmem, size = 0x9000, scoped, tag = 'internal scratch']
  %s0 = inlined_call_operand.vmem [shape: f32[8,128], index: 0, kind: input, shape index: {}]
  %s1 = inlined_call_operand.hbm [shape: f32[128,128], index: 1, kind: input, shape index: {}]
  %s2 = inlined_call_operand.vmem [shape: f32[1,128], index: 2, kind: input, shape index: {}]
  %s3 = inlined_call_operand.hbm [shape: f32[128,128], index: 3, kind: input, shape index: {}]
  %s4 = inlined_call_operand.vmem [shape: f32[1,128], index: 4, kind: input, shape index: {}]
  %s5 = inlined_call_operand.vmem [shape: f32[8,128], index: 5, kind: output, shape index: {}]
  %s6 = sld [smem:[#allocation0]]
  $region38: #{fwd.1} parent=0
    _
  %s8 = ssub.s32 1, %s6
  %s9 = scalar_select 0, %s8, %s6
  $region1: #{fwd.1} parent=0
    #allocation2 [shape = 'u8[65536]{0}', space=vmem, size = 0x10000, scoped, tag = 'input window, operand 1, single buffered']
    #allocation3 [shape = 's32[1]{0}', space=sflag, size = 0x4, scoped, tag = 'scoped memory for fwd.1']
    #allocation4 [shape = 'u8[65536]{0}', space=vmem, size = 0x10000, scoped, tag = 'input window, operand 3, single buffered']
    #allocation5 [shape = 's32[1]{0}', space=sflag, size = 0x4, scoped, tag = 'scoped memory for fwd.1']
    %10 = vsyncpa [#allocation3], 0
    %11 = vsyncpa [#allocation5], 0
    // Predicated region
    $region2: #{fwd.1} parent=1 // pred_check
      _
    $region3: #{fwd.1} parent=1 // pred_check_branch
      %13 = sbr.rel (0) target = $region5
    $region4: #{fwd.1} parent=1 // pred_region
      _
    $region5: #{fwd.1} parent=1 // pred_fallthru
      _
    // Predicated region
    $region6: #{fwd.1} parent=1 // pred_check
      _
    $region7: #{fwd.1} parent=1 // pred_check_branch
      %15 = sbr.rel (0) target = $region9
    $region8: #{fwd.1} parent=1 // pred_region
      %17 = vsyncadd [#allocation3], 0
      %s18 = sshll.u32 %s1, 4
      %s19 = int_to_ptr.hbm [resolvable:$true] %s18
      %s20 = sshll.u32 [#allocation2], 4
      %s21 = int_to_ptr.vmem [resolvable:$true] %s20
      %26 = dma.hbm_to_vmem [thread:$0]  %s19, 2048, %s21, [#allocation3], 128, 128, 8
    $region9: #{fwd.1} parent=1 // pred_fallthru
      _
    // Predicated region
    $region10: #{fwd.1} parent=1 // pred_check
      _
    $region11: #{fwd.1} parent=1 // pred_check_branch
      %28 = sbr.rel (0) target = $region13
    $region12: #{fwd.1} parent=1 // pred_region
      _
    $region13: #{fwd.1} parent=1 // pred_fallthru
      _
    // Predicated region
    $region14: #{fwd.1} parent=1 // pred_check
      _
    $region15: #{fwd.1} parent=1 // pred_check_branch
      %30 = sbr.rel (0) target = $region17
    $region16: #{fwd.1} parent=1 // pred_region
      %32 = vsyncadd [#allocation5], 0
      %s33 = sshll.u32 %s3, 4
      %s34 = int_to_ptr.hbm [resolvable:$true] %s33
      %s35 = sshll.u32 [#allocation4], 4
      %s36 = int_to_ptr.vmem [resolvable:$true] %s35
      %41 = dma.hbm_to_vmem [thread:$0]  %s34, 2048, %s36, [#allocation5], 128, 128, 8
    $region17: #{fwd.1} parent=1 // pred_fallthru
      _
    // Predicated region
    $region18: #{fwd.1} parent=1 // pred_check
      _
    $region19: #{fwd.1} parent=1 // pred_check_branch
      %43 = sbr.rel (0) target = $region21
    $region20: #{fwd.1} parent=1 // pred_region
      _
    $region21: #{fwd.1} parent=1 // pred_fallthru
      _
    // Predicated region
    $region22: #{fwd.1} parent=1 // pred_check
      _
    $region23: #{fwd.1} parent=1 // pred_check_branch
      %45 = sbr.rel (0) target = $region25
    $region24: #{fwd.1} parent=1 // pred_region
      %47 = dma.done [#allocation3], 2048
    $region25: #{fwd.1} parent=1 // pred_fallthru
      _
    // Predicated region
    $region26: #{fwd.1} parent=1 // pred_check
      _
    $region27: #{fwd.1} parent=1 // pred_check_branch
      %49 = sbr.rel (0) target = $region29
    $region28: #{fwd.1} parent=1 // pred_region
      %51 = dma.done [#allocation5], 2048
    $region29: #{fwd.1} parent=1 // pred_fallthru
      _
    %v52 = vld [vmem:[%s0] sm:$0xff]
    %v53 = vld [vmem:[#allocation2] sm:$0xff]
    %v54 = vld [vmem:[#allocation2 + $0x8] sm:$0xff]
    %v55 = vld [vmem:[#allocation2 + $0x10] sm:$0xff]
    %v56 = vld [vmem:[#allocation2 + $0x18] sm:$0xff]
    %v57 = vld [vmem:[#allocation2 + $0x20] sm:$0xff]
    %v58 = vld [vmem:[#allocation2 + $0x28] sm:$0xff]
    %v59 = vld [vmem:[#allocation2 + $0x30] sm:$0xff]
    %v60 = vld [vmem:[#allocation2 + $0x38] sm:$0xff]
    %v61 = vld [vmem:[#allocation2 + $0x40] sm:$0xff]
    %v62 = vld [vmem:[#allocation2 + $0x48] sm:$0xff]
    %v63 = vld [vmem:[#allocation2 + $0x50] sm:$0xff]
    %v64 = vld [vmem:[#allocation2 + $0x58] sm:$0xff]
    %v65 = vld [vmem:[#allocation2 + $0x60] sm:$0xff]
    %v66 = vld [vmem:[#allocation2 + $0x68] sm:$0xff]
    %v67 = vld [vmem:[#allocation2 + $0x70] sm:$0xff]
    %v68 = vld [vmem:[#allocation2 + $0x78] sm:$0xff]
    %v69 = vld [vmem:[%s2] sm:$0x1]
    %v71 = vperm.slane %v69, 0
    %73 = vmatpush.msra.mxu0 %v68
    %74 = vmatpush.msra.mxu0 %v67
    %75 = vmatpush.msra.mxu0 %v66
    %76 = vmatpush.msra.mxu0 %v65
    %77 = vmatpush.msra.mxu0 %v64
    %78 = vmatpush.msra.mxu0 %v63
    %79 = vmatpush.msra.mxu0 %v62
    %80 = vmatpush.msra.mxu0 %v61
    %81 = vmatpush.msra.mxu0 %v60
    %82 = vmatpush.msra.mxu0 %v59
    %83 = vmatpush.msra.mxu0 %v58
    %84 = vmatpush.msra.mxu0 %v57
    %85 = vmatpush.msra.mxu0 %v56
    %86 = vmatpush.msra.mxu0 %v55
    %87 = vmatpush.msra.mxu0 %v54
    %88 = vmatpush.msra.mxu0 %v53
    %89 = vmatmul.f32.gmra.mxu0 %v52
    %v90 = vpop.f32.mrf.mxu0
    %v91 = vadd.f32 %v71, %v90
    %92 = vdwg.mxu0
    %v93 = vtanh.pop %v91
    %v94 = vld [vmem:[#allocation4] sm:$0xff]
    %v95 = vld [vmem:[#allocation4 + $0x8] sm:$0xff]
    %v96 = vld [vmem:[#allocation4 + $0x10] sm:$0xff]
    %v97 = vld [vmem:[#allocation4 + $0x18] sm:$0xff]
    %v98 = vld [vmem:[#allocation4 + $0x20] sm:$0xff]
    %v99 = vld [vmem:[#allocation4 + $0x28] sm:$0xff]
    %v100 = vld [vmem:[#allocation4 + $0x30] sm:$0xff]
    %v101 = vld [vmem:[#allocation4 + $0x38] sm:$0xff]
    %v102 = vld [vmem:[#allocation4 + $0x40] sm:$0xff]
    %v103 = vld [vmem:[#allocation4 + $0x48] sm:$0xff]
    %v104 = vld [vmem:[#allocation4 + $0x50] sm:$0xff]
    %v105 = vld [vmem:[#allocation4 + $0x58] sm:$0xff]
    %v106 = vld [vmem:[#allocation4 + $0x60] sm:$0xff]
    %v107 = vld [vmem:[#allocation4 + $0x68] sm:$0xff]
    %v108 = vld [vmem:[#allocation4 + $0x70] sm:$0xff]
    %v109 = vld [vmem:[#allocation4 + $0x78] sm:$0xff]
    %v110 = vld [vmem:[%s4] sm:$0x1]
    %v112 = vperm.slane %v110, 0
    %114 = vmatpush.msra.mxu0 %v109
    %115 = vmatpush.msra.mxu0 %v108
    %116 = vmatpush.msra.mxu0 %v107
    %117 = vmatpush.msra.mxu0 %v106
    %118 = vmatpush.msra.mxu0 %v105
    %119 = vmatpush.msra.mxu0 %v104
    %120 = vmatpush.msra.mxu0 %v103
    %121 = vmatpush.msra.mxu0 %v102
    %122 = vmatpush.msra.mxu0 %v101
    %123 = vmatpush.msra.mxu0 %v100
    %124 = vmatpush.msra.mxu0 %v99
    %125 = vmatpush.msra.mxu0 %v98
    %126 = vmatpush.msra.mxu0 %v97
    %127 = vmatpush.msra.mxu0 %v96
    %128 = vmatpush.msra.mxu0 %v95
    %129 = vmatpush.msra.mxu0 %v94
    %130 = vmatmul.f32.gmra.mxu0 %v93
    %v131 = vpop.f32.mrf.mxu0
    %v132 = vadd.f32 %v112, %v131
    %133 = vdwg.mxu0
    %134 = vst [vmem:[%s5] sm:$0xff] %v132
    // Predicated region
    $region30: #{fwd.1} parent=1 // pred_check
      _
    $region31: #{fwd.1} parent=1 // pred_check_branch
      %136 = sbr.rel (0) target = $region33
    $region32: #{fwd.1} parent=1 // pred_region
      _
    $region33: #{fwd.1} parent=1 // pred_fallthru
      _
    // Predicated region
    $region34: #{fwd.1} parent=1 // pred_check
      _
    $region35: #{fwd.1} parent=1 // pred_check_branch
      %138 = sbr.rel (0) target = $region37
    $region36: #{fwd.1} parent=1 // pred_region
      _
    $region37: #{fwd.1} parent=1 // pred_fallthru
      _
    %139 = vsyncpa [#allocation3], 1
    %140 = vsyncpa [#allocation5], 1

</llo_original>
